<compile_context>
chip_gen: v5e
topology: v5e:2x2
jax: 0.10.0
libtpu: 0.0.40
codegen_flags: <defaults>
</compile_context>

<pallas_src>
import jax
import jax.numpy as jnp
import numpy as np
from jax.experimental import pallas as pl
from jax.experimental.pallas import tpu as pltpu


def _round_up(n, m):
    return ((n + m - 1) // m) * m


# ---------------------------------------------------------------------------
# One-time host-side packing of all weights/biases into two f32 slabs.
# ---------------------------------------------------------------------------
def pack_params(params, gnn_dim, bert_dim):
    f32 = jnp.float32
    Din = gnn_dim + bert_dim
    F = params["wg1"].shape[1]            # fusion_dim
    H = params["we2"].shape[0]            # hidden_dim
    Din_p = _round_up(Din + 1, 128)       # gnn || bert || t || zero-pad, 128-lane aligned

    def pad_rows(w, rows):
        w = jnp.asarray(w, f32)
        return jnp.pad(w, ((0, rows - w.shape[0]), (0, 0)))

    # ---- slab A (lane width 2F): fused [wg1|wp] block, wg2, biases ---------
    wg1 = pad_rows(params["wg1"], Din_p)                 # zero rows for t + pad cols of x
    wp = pad_rows(params["wp"], Din_p)
    w_xa = jnp.concatenate([wg1, wp], axis=1)            # [Din_p, 2F]
    wg2 = jnp.pad(jnp.asarray(params["wg2"], f32), ((0, 0), (0, F)))   # [F, 2F], right half zero
    bias_a = jnp.zeros((16, 2 * F), f32)
    bias_a = bias_a.at[0, :F].set(jnp.asarray(params["bg1"], f32).reshape(-1))   # bg1
    bias_a = bias_a.at[0, F:].set(jnp.asarray(params["bp"], f32).reshape(-1))    # bp
    bias_a = bias_a.at[8, :F].set(jnp.asarray(params["bg2"], f32).reshape(-1))   # bg2
    slab_a = jnp.concatenate([w_xa, wg2, bias_a], axis=0)

    # ---- slab B (lane width H): encoder + mu-head weights + their biases ---
    we1 = jnp.asarray(params["we1"], f32)                # [F+1, H] (last row = treatment)
    we1x = we1[:F]
    we1t = pad_rows(we1[F:F + 1], 8)
    w_heads = jnp.zeros((H, H), f32)
    w_heads = w_heads.at[:, 0].set(jnp.asarray(params["wm0"], f32).reshape(-1))
    w_heads = w_heads.at[:, 1].set(jnp.asarray(params["wm1"], f32).reshape(-1))
    bias_b = jnp.zeros((24, H), f32)
    bias_b = bias_b.at[0].set(jnp.asarray(params["be1"], f32).reshape(-1))
    bias_b = bias_b.at[8].set(jnp.asarray(params["be2"], f32).reshape(-1))
    bias_b = bias_b.at[16, 0].set(jnp.asarray(params["bm0"], f32).reshape(()))
    bias_b = bias_b.at[16, 1].set(jnp.asarray(params["bm1"], f32).reshape(()))
    slab_b = jnp.concatenate([we1x, we1t, jnp.asarray(params["we2"], f32),
                              w_heads, bias_b], axis=0)

    meta = dict(
        Din=Din, Din_p=Din_p, F=F, H=H,
        a_wxa=0, a_wg2=Din_p, a_bias=Din_p + F,
        b_we1x=0, b_we1t=F, b_we2=F + 8, b_wh=F + 8 + H, b_bias=F + 8 + 2 * H,
    )
    return slab_a, slab_b, meta


# ---------------------------------------------------------------------------
# Kernel
# ---------------------------------------------------------------------------
def _make_cans_kernel(meta):
    Din, Din_p, F, H = meta["Din"], meta["Din_p"], meta["F"], meta["H"]
    a_wxa, a_wg2, a_b = meta["a_wxa"], meta["a_wg2"], meta["a_bias"]
    b_we1x, b_we1t, b_we2, b_wh, b_b = (meta["b_we1x"], meta["b_we1t"],
                                        meta["b_we2"], meta["b_wh"],
                                        meta["b_bias"])

    def kernel(x_ref, wa_ref, wb_ref, out_ref):
        f32 = jnp.float32
        x = x_ref[...]                             # [TB, Din_p] = gnn||bert||t||0
        t = x_ref[:, Din:Din + 1]                  # [TB, 1] treatment column

        # ---- GatedFusion: single fused matmul for gate-hidden + proj -------
        y = jnp.dot(x, wa_ref[a_wxa:a_wxa + Din_p, :], preferred_element_type=f32)
        y = y + wa_ref[a_b:a_b + 1, :]             # [bg1 | bp]
        g1 = jnp.maximum(y[:, :F], 0.0)            # ReLU(x@wg1 + bg1)
        proj = y[:, F:]                            # x@wp + bp
        g2 = jnp.dot(g1, wa_ref[a_wg2:a_wg2 + F, :F], preferred_element_type=f32)
        gate = jax.nn.sigmoid(g2 + wa_ref[a_b + 8:a_b + 9, :F])   # EUP exp/recip
        fused = gate * proj                        # [TB, F]

        # ---- CFRNet encoder (treatment concat expressed as a rank-1 term) --
        h1 = (jnp.dot(fused, wb_ref[b_we1x:b_we1x + F, :], preferred_element_type=f32)
              + t * wb_ref[b_we1t:b_we1t + 1, :]
              + wb_ref[b_b:b_b + 1, :])
        h1 = jnp.maximum(h1, 0.0)
        h2 = jnp.dot(h1, wb_ref[b_we2:b_we2 + H, :], preferred_element_type=f32)
        h2 = jnp.maximum(h2 + wb_ref[b_b + 8:b_b + 9, :], 0.0)    # [TB, H]

        # ---- mu heads: single MXU matmul, cols 0/1 = mu0/mu1, biases folded
        heads = (jnp.dot(h2, wb_ref[b_wh:b_wh + H, :], preferred_element_type=f32)
                 + wb_ref[b_b + 16:b_b + 17, :])
        out_ref[...] = heads                       # lane-dense [TB, 128] store

    return kernel


# ---------------------------------------------------------------------------
# Wrapper
# ---------------------------------------------------------------------------
def _choose_tile(B):
    if B <= 128:
        return _round_up(max(B, 1), 8)             # single tile for tiny batches
    # keep the grid >= 2 steps so megacore (v7x, 2 TCs) can shard the batch,
    # but cap the tile at 1024 rows (f32 intermediates stay far under VMEM)
    half = _round_up((B + 1) // 2, 8)
    return min(1024, half)


def cans_forward(gnn_emb, bert_emb, treatment, packed):
    slab_a, slab_b, meta = packed
    f32 = jnp.float32
    B = gnn_emb.shape[0]
    Din, Din_p, F, H = meta["Din"], meta["Din_p"], meta["F"], meta["H"]
    assert gnn_emb.shape[1] + bert_emb.shape[1] == Din

    TB = _choose_tile(B)
    Bp = _round_up(B, TB)

    # Single fused concat (gnn || bert || t || zero-pad) feeding the kernel's
    # aligned K=128 matmul; batch rows padded to the tile multiple.
    pad_cols = Din_p - (Din + 1)
    pieces = [gnn_emb.astype(f32), bert_emb.astype(f32),
              treatment.reshape(B, 1).astype(f32)]
    if pad_cols:
        pieces.append(jnp.zeros((B, pad_cols), f32))
    x = jnp.concatenate(pieces, axis=-1)                 # [B, Din_p]
    if Bp > B:
        x = jnp.pad(x, ((0, Bp - B), (0, 0)))            # [Bp, Din_p]

    cost = pl.CostEstimate(
        flops=int(2 * Bp * (Din_p * 2 * F + F * F + F * H + 2 * H * H)),
        transcendentals=int(Bp * F),
        bytes_accessed=int(4 * (Bp * Din_p + slab_a.size + slab_b.size + Bp * H)),
    )

    kernel = _make_cans_kernel(meta)
    heads = pl.pallas_call(
        kernel,
        out_shape=jax.ShapeDtypeStruct((Bp, H), jnp.float32),
        grid=(Bp // TB,),
        in_specs=[
            pl.BlockSpec((TB, Din_p), lambda i: (i, 0)),     # batch-tiled input
            pl.BlockSpec(slab_a.shape, lambda i: (0, 0)),    # VMEM-resident weights
            pl.BlockSpec(slab_b.shape, lambda i: (0, 0)),    # VMEM-resident weights
        ],
        out_specs=pl.BlockSpec((TB, H), lambda i: (i, 0)),   # lane-dense output
        compiler_params=pltpu.CompilerParams(
            dimension_semantics=("parallel",),
            vmem_limit_bytes=32 * 1024 * 1024),
        cost_estimate=cost,
    )(x, slab_a, slab_b)

    mu0 = heads[:B, 0:1]
    mu1 = heads[:B, 1:2]
    return mu0, mu1


# ---------------------------------------------------------------------------
# Plain-JAX reference mirroring the PyTorch module exactly.
# ---------------------------------------------------------------------------
def reference_forward(gnn_emb, bert_emb, treatment, params):
    combined = jnp.concatenate([gnn_emb, bert_emb], axis=-1)
    g = jnp.maximum(combined @ params["wg1"] + params["bg1"], 0.0)
    gate = jax.nn.sigmoid(g @ params["wg2"] + params["bg2"])
    proj = combined @ params["wp"] + params["bp"]
    fused = gate * proj
    xt = jnp.concatenate([fused, treatment.reshape(-1, 1)], axis=-1)
    h = jnp.maximum(xt @ params["we1"] + params["be1"], 0.0)
    h = jnp.maximum(h @ params["we2"] + params["be2"], 0.0)
    mu0 = jnp.sum(h * params["wm0"], axis=-1, keepdims=True) + params["bm0"]
    mu1 = jnp.sum(h * params["wm1"], axis=-1, keepdims=True) + params["bm1"]
    return mu0, mu1


def init_params(key, gnn_dim, bert_dim, fusion_dim, hidden_dim):
    ks = jax.random.split(key, 10)
    s = lambda fan_in: 1.0 / np.sqrt(fan_in)
    Din = gnn_dim + bert_dim
    return {
        # GatedFusion
        "wg1": jax.random.normal(ks[0], (Din, fusion_dim), jnp.float32) * s(Din),
        "bg1": jnp.zeros((1, fusion_dim), jnp.float32),
        "wg2": jax.random.normal(ks[1], (fusion_dim, fusion_dim), jnp.float32) * s(fusion_dim),
        "bg2": jnp.zeros((1, fusion_dim), jnp.float32),
        "wp":  jax.random.normal(ks[2], (Din, fusion_dim), jnp.float32) * s(Din),
        "bp":  jnp.zeros((1, fusion_dim), jnp.float32),
        # CFRNet
        "we1": jax.random.normal(ks[3], (fusion_dim + 1, hidden_dim), jnp.float32) * s(fusion_dim + 1),
        "be1": jnp.zeros((1, hidden_dim), jnp.float32),
        "we2": jax.random.normal(ks[4], (hidden_dim, hidden_dim), jnp.float32) * s(hidden_dim),
        "be2": jnp.zeros((1, hidden_dim), jnp.float32),
        "wm0": jax.random.normal(ks[5], (1, hidden_dim), jnp.float32) * s(hidden_dim),
        "bm0": jax.random.normal(ks[6], (1, 1), jnp.float32) * s(hidden_dim),
        "wm1": jax.random.normal(ks[7], (1, hidden_dim), jnp.float32) * s(hidden_dim),
        "bm1": jax.random.normal(ks[8], (1, 1), jnp.float32) * s(hidden_dim),
    }


if __name__ == "__main__":
    GNN_DIM, BERT_DIM = 32, 32
    FUSION_DIM, HIDDEN_DIM = 256, 128          # PyTorch defaults

    key = jax.random.PRNGKey(0)
    k_p, k_data = jax.random.split(key)
    params = init_params(k_p, GNN_DIM, BERT_DIM, FUSION_DIM, HIDDEN_DIM)
    packed = pack_params(params, GNN_DIM, BERT_DIM)   # done once, not per call

    # B=8: single-tile path.  B=200: grid=(2,) with TB=104 and batch padding.
    for B in (8, 200):
        k_g, k_b, k_t = jax.random.split(jax.random.fold_in(k_data, B), 3)
        # Stand-ins for gnn(graph_data) and text_encoder(...).last_hidden_state[:,0,:]
        gnn_emb = jax.random.normal(k_g, (B, GNN_DIM), jnp.float32)
        bert_emb = jax.random.normal(k_b, (B, BERT_DIM), jnp.float32)
        treatment = jax.random.bernoulli(k_t, 0.5, (B,)).astype(jnp.float32)

        mu0, mu1 = cans_forward(gnn_emb, bert_emb, treatment, packed)
        jax.block_until_ready((mu0, mu1))

        mu0_ref, mu1_ref = reference_forward(gnn_emb, bert_emb, treatment, params)
        np.testing.assert_allclose(np.asarray(mu0), np.asarray(mu0_ref), rtol=1e-3, atol=1e-3)
        np.testing.assert_allclose(np.asarray(mu1), np.asarray(mu1_ref), rtol=1e-3, atol=1e-3)

    print("KERNEL_OK")
</pallas_src>

<mosaic_0001>
module attributes {stable_mosaic.version = 11 : i64} {
  func.func @kernel(%arg0: i32, %arg1: memref<8x128xf32, #tpu.memory_space<vmem>>, %arg2: memref<400x512xf32, #tpu.memory_space<vmem>>, %arg3: memref<544x128xf32, #tpu.memory_space<vmem>>, %arg4: memref<8x128xf32, #tpu.memory_space<vmem>>) attributes {dimension_semantics = [#tpu.dimension_semantics<parallel>], iteration_bounds = array<i64: 1>, scalar_prefetch = 0 : i64, scratch_operands = 0 : i64, tpu.core_type = #tpu.core_type<tc>, window_params = [{transform_indices = @transform_0, window_bounds = array<i64: 8, 128>}, {pipeline_mode = #tpu.pipeline_mode<synchronous>, transform_indices = @transform_1, window_bounds = array<i64: 400, 512>}, {pipeline_mode = #tpu.pipeline_mode<synchronous>, transform_indices = @transform_2, window_bounds = array<i64: 544, 128>}, {transform_indices = @transform_3, window_bounds = array<i64: 8, 128>}]} {
    %c0 = arith.constant 0 : index
    %c0_0 = arith.constant 0 : index
    %0 = vector.load %arg1[%c0, %c0_0] : memref<8x128xf32, #tpu.memory_space<vmem>>, vector<8x128xf32>
    %c0_1 = arith.constant 0 : index
    %c64 = arith.constant 64 : index
    %1 = vector.load %arg1[%c0_1, %c64] : memref<8x128xf32, #tpu.memory_space<vmem>>, vector<8x1xf32>
    %c0_2 = arith.constant 0 : index
    %c0_3 = arith.constant 0 : index
    %2 = vector.load %arg2[%c0_2, %c0_3] : memref<400x512xf32, #tpu.memory_space<vmem>>, vector<128x512xf32>
    %cst = arith.constant dense<0.000000e+00> : vector<8x512xf32>
    %3 = tpu.matmul %0, %2, %cst {dimension_numbers = #tpu.dot_dimension_numbers<[1], [0], [0], [1], [0, 0, 1, 1], [], []>} : vector<8x128xf32>, vector<128x512xf32>, vector<8x512xf32> -> vector<8x512xf32>
    %c384 = arith.constant 384 : index
    %c0_4 = arith.constant 0 : index
    %4 = vector.load %arg2[%c384, %c0_4] : memref<400x512xf32, #tpu.memory_space<vmem>>, vector<1x512xf32>
    %5 = vector.broadcast %4 : vector<1x512xf32> to vector<8x512xf32>
    %6 = arith.addf %3, %5 : vector<8x512xf32>
    %7 = vector.extract_strided_slice %6 {offsets = [0, 0], sizes = [8, 256], strides = [1, 1]} : vector<8x512xf32> to vector<8x256xf32>
    %cst_5 = arith.constant 0.000000e+00 : f32
    %8 = vector.broadcast %cst_5 : f32 to vector<8x256xf32>
    %9 = arith.maximumf %7, %8 : vector<8x256xf32>
    %10 = vector.extract_strided_slice %6 {offsets = [0, 256], sizes = [8, 256], strides = [1, 1]} : vector<8x512xf32> to vector<8x256xf32>
    %c128 = arith.constant 128 : index
    %c0_6 = arith.constant 0 : index
    %11 = vector.load %arg2[%c128, %c0_6] : memref<400x512xf32, #tpu.memory_space<vmem>>, vector<256x256xf32>
    %cst_7 = arith.constant dense<0.000000e+00> : vector<8x256xf32>
    %12 = tpu.matmul %9, %11, %cst_7 {dimension_numbers = #tpu.dot_dimension_numbers<[1], [0], [0], [1], [0, 0, 1, 1], [], []>} : vector<8x256xf32>, vector<256x256xf32>, vector<8x256xf32> -> vector<8x256xf32>
    %c392 = arith.constant 392 : index
    %c0_8 = arith.constant 0 : index
    %13 = vector.load %arg2[%c392, %c0_8] : memref<400x512xf32, #tpu.memory_space<vmem>>, vector<1x256xf32>
    %14 = vector.broadcast %13 : vector<1x256xf32> to vector<8x256xf32>
    %15 = arith.addf %12, %14 : vector<8x256xf32>
    %16 = arith.negf %15 : vector<8x256xf32>
    %17 = math.exp %16 : vector<8x256xf32>
    %cst_9 = arith.constant 1.000000e+00 : f32
    %18 = vector.broadcast %cst_9 : f32 to vector<8x256xf32>
    %19 = arith.addf %18, %17 : vector<8x256xf32>
    %20 = arith.divf %18, %19 : vector<8x256xf32>
    %21 = arith.mulf %20, %10 : vector<8x256xf32>
    %c0_10 = arith.constant 0 : index
    %c0_11 = arith.constant 0 : index
    %22 = vector.load %arg3[%c0_10, %c0_11] : memref<544x128xf32, #tpu.memory_space<vmem>>, vector<256x128xf32>
    %cst_12 = arith.constant dense<0.000000e+00> : vector<8x128xf32>
    %23 = tpu.matmul %21, %22, %cst_12 {dimension_numbers = #tpu.dot_dimension_numbers<[1], [0], [0], [1], [0, 0, 1, 1], [], []>} : vector<8x256xf32>, vector<256x128xf32>, vector<8x128xf32> -> vector<8x128xf32>
    %c256 = arith.constant 256 : index
    %c0_13 = arith.constant 0 : index
    %24 = vector.load %arg3[%c256, %c0_13] : memref<544x128xf32, #tpu.memory_space<vmem>>, vector<1x128xf32>
    %25 = vector.broadcast %1 : vector<8x1xf32> to vector<8x128xf32>
    %26 = vector.broadcast %24 : vector<1x128xf32> to vector<8x128xf32>
    %27 = arith.mulf %25, %26 : vector<8x128xf32>
    %28 = arith.addf %23, %27 : vector<8x128xf32>
    %c520 = arith.constant 520 : index
    %c0_14 = arith.constant 0 : index
    %29 = vector.load %arg3[%c520, %c0_14] : memref<544x128xf32, #tpu.memory_space<vmem>>, vector<1x128xf32>
    %30 = vector.broadcast %29 : vector<1x128xf32> to vector<8x128xf32>
    %31 = arith.addf %28, %30 : vector<8x128xf32>
    %cst_15 = arith.constant 0.000000e+00 : f32
    %32 = vector.broadcast %cst_15 : f32 to vector<8x128xf32>
    %33 = arith.maximumf %31, %32 : vector<8x128xf32>
    %c264 = arith.constant 264 : index
    %c0_16 = arith.constant 0 : index
    %34 = vector.load %arg3[%c264, %c0_16] : memref<544x128xf32, #tpu.memory_space<vmem>>, vector<128x128xf32>
    %cst_17 = arith.constant dense<0.000000e+00> : vector<8x128xf32>
    %35 = tpu.matmul %33, %34, %cst_17 {dimension_numbers = #tpu.dot_dimension_numbers<[1], [0], [0], [1], [0, 0, 1, 1], [], []>} : vector<8x128xf32>, vector<128x128xf32>, vector<8x128xf32> -> vector<8x128xf32>
    %c528 = arith.constant 528 : index
    %c0_18 = arith.constant 0 : index
    %36 = vector.load %arg3[%c528, %c0_18] : memref<544x128xf32, #tpu.memory_space<vmem>>, vector<1x128xf32>
    %37 = vector.broadcast %36 : vector<1x128xf32> to vector<8x128xf32>
    %38 = arith.addf %35, %37 : vector<8x128xf32>
    %cst_19 = arith.constant 0.000000e+00 : f32
    %39 = vector.broadcast %cst_19 : f32 to vector<8x128xf32>
    %40 = arith.maximumf %38, %39 : vector<8x128xf32>
    %c392_20 = arith.constant 392 : index
    %c0_21 = arith.constant 0 : index
    %41 = vector.load %arg3[%c392_20, %c0_21] : memref<544x128xf32, #tpu.memory_space<vmem>>, vector<128x128xf32>
    %cst_22 = arith.constant dense<0.000000e+00> : vector<8x128xf32>
    %42 = tpu.matmul %40, %41, %cst_22 {dimension_numbers = #tpu.dot_dimension_numbers<[1], [0], [0], [1], [0, 0, 1, 1], [], []>} : vector<8x128xf32>, vector<128x128xf32>, vector<8x128xf32> -> vector<8x128xf32>
    %c536 = arith.constant 536 : index
    %c0_23 = arith.constant 0 : index
    %43 = vector.load %arg3[%c536, %c0_23] : memref<544x128xf32, #tpu.memory_space<vmem>>, vector<1x128xf32>
    %44 = vector.broadcast %43 : vector<1x128xf32> to vector<8x128xf32>
    %45 = arith.addf %42, %44 : vector<8x128xf32>
    %c0_24 = arith.constant 0 : index
    %c0_25 = arith.constant 0 : index
    %46 = vector.load %arg4[%c0_24, %c0_25] : memref<8x128xf32, #tpu.memory_space<vmem>>, vector<8x128xf32>
    tpu.vector_store %arg4[%c0_24, %c0_25], %45 {strides = array<i32>} : memref<8x128xf32, #tpu.memory_space<vmem>>, vector<8x128xf32>,
    return
  }
  func.func @transform_0(%arg0: i32) -> (i32, i32) {
    %c0_i32 = arith.constant 0 : i32
    %c0_i32_0 = arith.constant 0 : i32
    return %arg0, %c0_i32 : i32, i32
  }
  func.func @transform_1(%arg0: i32) -> (i32, i32) {
    %c0_i32 = arith.constant 0 : i32
    %c0_i32_0 = arith.constant 0 : i32
    %c0_i32_1 = arith.constant 0 : i32
    return %c0_i32, %c0_i32_0 : i32, i32
  }
  func.func @transform_2(%arg0: i32) -> (i32, i32) {
    %c0_i32 = arith.constant 0 : i32
    %c0_i32_0 = arith.constant 0 : i32
    %c0_i32_1 = arith.constant 0 : i32
    return %c0_i32, %c0_i32_0 : i32, i32
  }
  func.func @transform_3(%arg0: i32) -> (i32, i32) {
    %c0_i32 = arith.constant 0 : i32
    %c0_i32_0 = arith.constant 0 : i32
    return %arg0, %c0_i32 : i32, i32
  }
}

</mosaic_0001>

<llo_original>
// kernel: tpu_custom_call.1
$region0: #{tpu_custom_call.1}
  #allocation0 [shape = 'u32[]', space=smem, size = 0x4, offset = 0x4, fixed_abs, tag = 'smem constant byte address 0x4 - core index']
  #allocation1 [shape = 'u32[72,128]{1,0:T(1,128)}', space=vmem, size = 0x9000, scoped, tag = 'internal scratch']
  %s0 = inlined_call_operand.hbm [shape: f32[8,128], index: 0, kind: input, shape index: {}]
  %s1 = inlined_call_operand.hbm [shape: f32[400,512], index: 1, kind: input, shape index: {}]
  %s2 = inlined_call_operand.hbm [shape: f32[544,128], index: 2, kind: input, shape index: {}]
  %s3 = inlined_call_operand.hbm [shape: f32[8,128], index: 3, kind: output, shape index: {}]
  %s4 = sld [smem:[#allocation0]]
  $region34: #{tpu_custom_call.1} parent=0
    _
  %s6 = ssub.s32 1, %s4
  %s7 = scalar_select 0, %s6, %s4
  $region1: #{tpu_custom_call.1} parent=0
    #allocation2 [shape = 'u8[4096]{0}', space=vmem, size = 0x1000, scoped, tag = 'input window, operand 0, single buffered']
    #allocation3 [shape = 's32[1]{0}', space=sflag, size = 0x4, scoped, tag = 'scoped memory for tpu_custom_call.1']
    #allocation4 [shape = 's32[1]{0}', space=sflag, size = 0x4, scoped, tag = 'scoped memory for tpu_custom_call.1']
    #allocation5 [shape = 'u8[819200]{0}', space=vmem, size = 0xc8000, scoped, tag = 'input window, operand 1, single buffered']
    #allocation6 [shape = 's32[1]{0}', space=sflag, size = 0x4, scoped, tag = 'scoped memory for tpu_custom_call.1']
    #allocation7 [shape = 'u8[278528]{0}', space=vmem, size = 0x44000, scoped, tag = 'input window, operand 2, single buffered']
    #allocation8 [shape = 'u8[4096]{0}', space=vmem, size = 0x1000, scoped, tag = 'output window, operand 0, single buffered']
    %8 = vsyncpa [#allocation3], 0
    %9 = vsyncpa [#allocation6], 0
    %10 = vsyncpa [#allocation4], 0
    // Predicated region
    $region2: #{tpu_custom_call.1} parent=1 // pred_check
      _
    $region3: #{tpu_custom_call.1} parent=1 // pred_check_branch
      %12 = sbr.rel (0) target = $region5
    $region4: #{tpu_custom_call.1} parent=1 // pred_region
      %14 = vsyncadd [#allocation3], 0
      %s16 = sshll.u32 %s0, 4
      %s17 = int_to_ptr.hbm [resolvable:$true] %s16
      %s18 = sshll.u32 [#allocation2], 4
      %s19 = int_to_ptr.vmem [resolvable:$true] %s18
      %21 = dma.hbm_to_vmem [thread:$0]  %s17, 128, %s19, [#allocation3]
    $region5: #{tpu_custom_call.1} parent=1 // pred_fallthru
      _
    // Predicated region
    $region6: #{tpu_custom_call.1} parent=1 // pred_check
      _
    $region7: #{tpu_custom_call.1} parent=1 // pred_check_branch
      %23 = sbr.rel (0) target = $region9
    $region8: #{tpu_custom_call.1} parent=1 // pred_region
      %25 = vsyncadd [#allocation6], 0
      %s26 = sshll.u32 %s1, 4
      %s27 = int_to_ptr.hbm [resolvable:$true] %s26
      %s28 = sshll.u32 [#allocation5], 4
      %s29 = int_to_ptr.vmem [resolvable:$true] %s28
      %34 = dma.hbm_to_vmem [thread:$0]  %s27, 25600, %s29, [#allocation6], 512, 512, 32
    $region9: #{tpu_custom_call.1} parent=1 // pred_fallthru
      _
    // Predicated region
    $region10: #{tpu_custom_call.1} parent=1 // pred_check
      _
    $region11: #{tpu_custom_call.1} parent=1 // pred_check_branch
      %36 = sbr.rel (0) target = $region13
    $region12: #{tpu_custom_call.1} parent=1 // pred_region
      %38 = vsyncadd [#allocation6], 0
      %s39 = sshll.u32 %s2, 4
      %s40 = int_to_ptr.hbm [resolvable:$true] %s39
      %s41 = sshll.u32 [#allocation7], 4
      %s42 = int_to_ptr.vmem [resolvable:$true] %s41
      %47 = dma.hbm_to_vmem [thread:$0]  %s40, 8704, %s42, [#allocation6], 128, 128, 8
    $region13: #{tpu_custom_call.1} parent=1 // pred_fallthru
      _
    // Predicated region
    $region14: #{tpu_custom_call.1} parent=1 // pred_check
      _
    $region15: #{tpu_custom_call.1} parent=1 // pred_check_branch
      %49 = sbr.rel (0) target = $region17
    $region16: #{tpu_custom_call.1} parent=1 // pred_region
      %51 = dma.done [#allocation3], 128
    $region17: #{tpu_custom_call.1} parent=1 // pred_fallthru
      _
    // Predicated region
    $region18: #{tpu_custom_call.1} parent=1 // pred_check
      _
    $region19: #{tpu_custom_call.1} parent=1 // pred_check_branch
      %53 = sbr.rel (0) target = $region21
    $region20: #{tpu_custom_call.1} parent=1 // pred_region
      %55 = dma.done [#allocation6], 25600
    $region21: #{tpu_custom_call.1} parent=1 // pred_fallthru
      _
    // Predicated region
    $region22: #{tpu_custom_call.1} parent=1 // pred_check
      _
    $region23: #{tpu_custom_call.1} parent=1 // pred_check_branch
      %57 = sbr.rel (0) target = $region25
    $region24: #{tpu_custom_call.1} parent=1 // pred_region
      %59 = dma.done [#allocation6], 8704
    $region25: #{tpu_custom_call.1} parent=1 // pred_fallthru
      _
    %v60 = vld [vmem:[#allocation2] sm:$0xff]
    %v61 = vld [vmem:[#allocation5] sm:$0xff]
    %v62 = vld [vmem:[#allocation5 + $0x8] sm:$0xff]
    %v63 = vld [vmem:[#allocation5 + $0x10] sm:$0xff]
    %v64 = vld [vmem:[#allocation5 + $0x18] sm:$0xff]
    %v65 = vld [vmem:[#allocation5 + $0x20] sm:$0xff]
    %v66 = vld [vmem:[#allocation5 + $0x28] sm:$0xff]
    %v67 = vld [vmem:[#allocation5 + $0x30] sm:$0xff]
    %v68 = vld [vmem:[#allocation5 + $0x38] sm:$0xff]
    %v69 = vld [vmem:[#allocation5 + $0x40] sm:$0xff]
    %v70 = vld [vmem:[#allocation5 + $0x48] sm:$0xff]
    %v71 = vld [vmem:[#allocation5 + $0x50] sm:$0xff]
    %v72 = vld [vmem:[#allocation5 + $0x58] sm:$0xff]
    %v73 = vld [vmem:[#allocation5 + $0x60] sm:$0xff]
    %v74 = vld [vmem:[#allocation5 + $0x68] sm:$0xff]
    %v75 = vld [vmem:[#allocation5 + $0x70] sm:$0xff]
    %v76 = vld [vmem:[#allocation5 + $0x78] sm:$0xff]
    %v77 = vld [vmem:[#allocation5 + $0x80] sm:$0xff]
    %v78 = vld [vmem:[#allocation5 + $0x88] sm:$0xff]
    %v79 = vld [vmem:[#allocation5 + $0x90] sm:$0xff]
    %v80 = vld [vmem:[#allocation5 + $0x98] sm:$0xff]
    %v81 = vld [vmem:[#allocation5 + $0xa0] sm:$0xff]
    %v82 = vld [vmem:[#allocation5 + $0xa8] sm:$0xff]
    %v83 = vld [vmem:[#allocation5 + $0xb0] sm:$0xff]
    %v84 = vld [vmem:[#allocation5 + $0xb8] sm:$0xff]
    %v85 = vld [vmem:[#allocation5 + $0xc0] sm:$0xff]
    %v86 = vld [vmem:[#allocation5 + $0xc8] sm:$0xff]
    %v87 = vld [vmem:[#allocation5 + $0xd0] sm:$0xff]
    %v88 = vld [vmem:[#allocation5 + $0xd8] sm:$0xff]
    %v89 = vld [vmem:[#allocation5 + $0xe0] sm:$0xff]
    %v90 = vld [vmem:[#allocation5 + $0xe8] sm:$0xff]
    %v91 = vld [vmem:[#allocation5 + $0xf0] sm:$0xff]
    %v92 = vld [vmem:[#allocation5 + $0xf8] sm:$0xff]
    %v93 = vld [vmem:[#allocation5 + $0x100] sm:$0xff]
    %v94 = vld [vmem:[#allocation5 + $0x108] sm:$0xff]
    %v95 = vld [vmem:[#allocation5 + $0x110] sm:$0xff]
    %v96 = vld [vmem:[#allocation5 + $0x118] sm:$0xff]
    %v97 = vld [vmem:[#allocation5 + $0x120] sm:$0xff]
    %v98 = vld [vmem:[#allocation5 + $0x128] sm:$0xff]
    %v99 = vld [vmem:[#allocation5 + $0x130] sm:$0xff]
    %v100 = vld [vmem:[#allocation5 + $0x138] sm:$0xff]
    %v101 = vld [vmem:[#allocation5 + $0x140] sm:$0xff]
    %v102 = vld [vmem:[#allocation5 + $0x148] sm:$0xff]
    %v103 = vld [vmem:[#allocation5 + $0x150] sm:$0xff]
    %v104 = vld [vmem:[#allocation5 + $0x158] sm:$0xff]
    %v105 = vld [vmem:[#allocation5 + $0x160] sm:$0xff]
    %v106 = vld [vmem:[#allocation5 + $0x168] sm:$0xff]
    %v107 = vld [vmem:[#allocation5 + $0x170] sm:$0xff]
    %v108 = vld [vmem:[#allocation5 + $0x178] sm:$0xff]
    %v109 = vld [vmem:[#allocation5 + $0x180] sm:$0xff]
    %v110 = vld [vmem:[#allocation5 + $0x188] sm:$0xff]
    %v111 = vld [vmem:[#allocation5 + $0x190] sm:$0xff]
    %v112 = vld [vmem:[#allocation5 + $0x198] sm:$0xff]
    %v113 = vld [vmem:[#allocation5 + $0x1a0] sm:$0xff]
    %v114 = vld [vmem:[#allocation5 + $0x1a8] sm:$0xff]
    %v115 = vld [vmem:[#allocation5 + $0x1b0] sm:$0xff]
    %v116 = vld [vmem:[#allocation5 + $0x1b8] sm:$0xff]
    %v117 = vld [vmem:[#allocation5 + $0x1c0] sm:$0xff]
    %v118 = vld [vmem:[#allocation5 + $0x1c8] sm:$0xff]
    %v119 = vld [vmem:[#allocation5 + $0x1d0] sm:$0xff]
    %v120 = vld [vmem:[#allocation5 + $0x1d8] sm:$0xff]
    %v121 = vld [vmem:[#allocation5 + $0x1e0] sm:$0xff]
    %v122 = vld [vmem:[#allocation5 + $0x1e8] sm:$0xff]
    %v123 = vld [vmem:[#allocation5 + $0x1f0] sm:$0xff]
    %v124 = vld [vmem:[#allocation5 + $0x1f8] sm:$0xff]
    %s125 = scalar_lea.vmem [#allocation5], 1536
    %v126 = vld [vmem:[%s125] ss:$8 sm:$0xf]
    %v128 = vperm.slane %v126, 0
    %v129 = vperm.slane %v126, 1
    %v130 = vperm.slane %v126, 2
    %v131 = vperm.slane %v126, 3
    %136 = vmatpush.msra.mxu0 %v121
    %137 = vmatpush.msra.mxu0 %v117
    %138 = vmatpush.msra.mxu0 %v113
    %139 = vmatpush.msra.mxu0 %v109
    %140 = vmatpush.msra.mxu0 %v105
    %141 = vmatpush.msra.mxu0 %v101
    %142 = vmatpush.msra.mxu0 %v97
    %143 = vmatpush.msra.mxu0 %v93
    %144 = vmatpush.msra.mxu0 %v89
    %145 = vmatpush.msra.mxu0 %v85
    %146 = vmatpush.msra.mxu0 %v81
    %147 = vmatpush.msra.mxu0 %v77
    %148 = vmatpush.msra.mxu0 %v73
    %149 = vmatpush.msra.mxu0 %v69
    %150 = vmatpush.msra.mxu0 %v65
    %151 = vmatpush.msra.mxu0 %v61
    %152 = vmatmul.f32.gmra.mxu0 %v60
    %v153 = vpop.f32.mrf.mxu0
    %v154 = vadd.f32 %v128, %v153
    %155 = vdwg.mxu0
    %156 = vmatpush.msra.mxu0 %v122
    %157 = vmatpush.msra.mxu0 %v118
    %158 = vmatpush.msra.mxu0 %v114
    %159 = vmatpush.msra.mxu0 %v110
    %160 = vmatpush.msra.mxu0 %v106
    %161 = vmatpush.msra.mxu0 %v102
    %162 = vmatpush.msra.mxu0 %v98
    %163 = vmatpush.msra.mxu0 %v94
    %164 = vmatpush.msra.mxu0 %v90
    %165 = vmatpush.msra.mxu0 %v86
    %166 = vmatpush.msra.mxu0 %v82
    %167 = vmatpush.msra.mxu0 %v78
    %168 = vmatpush.msra.mxu0 %v74
    %169 = vmatpush.msra.mxu0 %v70
    %170 = vmatpush.msra.mxu0 %v66
    %171 = vmatpush.msra.mxu0 %v62
    %172 = vmatmul.f32.gmra.mxu0 %v60
    %v173 = vpop.f32.mrf.mxu0
    %v174 = vadd.f32 %v129, %v173
    %175 = vdwg.mxu0
    %176 = vmatpush.msra.mxu0 %v123
    %177 = vmatpush.msra.mxu0 %v119
    %178 = vmatpush.msra.mxu0 %v115
    %179 = vmatpush.msra.mxu0 %v111
    %180 = vmatpush.msra.mxu0 %v107
    %181 = vmatpush.msra.mxu0 %v103
    %182 = vmatpush.msra.mxu0 %v99
    %183 = vmatpush.msra.mxu0 %v95
    %184 = vmatpush.msra.mxu0 %v91
    %185 = vmatpush.msra.mxu0 %v87
    %186 = vmatpush.msra.mxu0 %v83
    %187 = vmatpush.msra.mxu0 %v79
    %188 = vmatpush.msra.mxu0 %v75
    %189 = vmatpush.msra.mxu0 %v71
    %190 = vmatpush.msra.mxu0 %v67
    %191 = vmatpush.msra.mxu0 %v63
    %192 = vmatmul.f32.gmra.mxu0 %v60
    %v193 = vpop.f32.mrf.mxu0
    %v194 = vadd.f32 %v130, %v193
    %195 = vdwg.mxu0
    %196 = vmatpush.msra.mxu0 %v124
    %197 = vmatpush.msra.mxu0 %v120
    %198 = vmatpush.msra.mxu0 %v116
    %199 = vmatpush.msra.mxu0 %v112
    %200 = vmatpush.msra.mxu0 %v108
    %201 = vmatpush.msra.mxu0 %v104
    %202 = vmatpush.msra.mxu0 %v100
    %203 = vmatpush.msra.mxu0 %v96
    %204 = vmatpush.msra.mxu0 %v92
    %205 = vmatpush.msra.mxu0 %v88
    %206 = vmatpush.msra.mxu0 %v84
    %207 = vmatpush.msra.mxu0 %v80
    %208 = vmatpush.msra.mxu0 %v76
    %209 = vmatpush.msra.mxu0 %v72
    %210 = vmatpush.msra.mxu0 %v68
    %211 = vmatpush.msra.mxu0 %v64
    %212 = vmatmul.f32.gmra.mxu0 %v60
    %v213 = vpop.f32.mrf.mxu0
    %v214 = vadd.f32 %v131, %v213
    %215 = vdwg.mxu0
    %v216 = vmax.f32 %v154, 0.0
    %v217 = vmax.f32 %v174, 0.0
    %v218 = vld [vmem:[#allocation5 + $0x200] sm:$0xff]
    %v219 = vld [vmem:[#allocation5 + $0x208] sm:$0xff]
    %v220 = vld [vmem:[#allocation5 + $0x220] sm:$0xff]
    %v221 = vld [vmem:[#allocation5 + $0x228] sm:$0xff]
    %v222 = vld [vmem:[#allocation5 + $0x240] sm:$0xff]
    %v223 = vld [vmem:[#allocation5 + $0x248] sm:$0xff]
    %v224 = vld [vmem:[#allocation5 + $0x260] sm:$0xff]
    %v225 = vld [vmem:[#allocation5 + $0x268] sm:$0xff]
    %v226 = vld [vmem:[#allocation5 + $0x280] sm:$0xff]
    %v227 = vld [vmem:[#allocation5 + $0x288] sm:$0xff]
    %v228 = vld [vmem:[#allocation5 + $0x2a0] sm:$0xff]
    %v229 = vld [vmem:[#allocation5 + $0x2a8] sm:$0xff]
    %v230 = vld [vmem:[#allocation5 + $0x2c0] sm:$0xff]
    %v231 = vld [vmem:[#allocation5 + $0x2c8] sm:$0xff]
    %v232 = vld [vmem:[#allocation5 + $0x2e0] sm:$0xff]
    %v233 = vld [vmem:[#allocation5 + $0x2e8] sm:$0xff]
    %v234 = vld [vmem:[#allocation5 + $0x300] sm:$0xff]
    %v235 = vld [vmem:[#allocation5 + $0x308] sm:$0xff]
    %v236 = vld [vmem:[#allocation5 + $0x320] sm:$0xff]
    %v237 = vld [vmem:[#allocation5 + $0x328] sm:$0xff]
    %v238 = vld [vmem:[#allocation5 + $0x340] sm:$0xff]
    %v239 = vld [vmem:[#allocation5 + $0x348] sm:$0xff]
    %v240 = vld [vmem:[#allocation5 + $0x360] sm:$0xff]
    %v241 = vld [vmem:[#allocation5 + $0x368] sm:$0xff]
    %v242 = vld [vmem:[#allocation5 + $0x380] sm:$0xff]
    %v243 = vld [vmem:[#allocation5 + $0x388] sm:$0xff]
    %v244 = vld [vmem:[#allocation5 + $0x3a0] sm:$0xff]
    %v245 = vld [vmem:[#allocation5 + $0x3a8] sm:$0xff]
    %v246 = vld [vmem:[#allocation5 + $0x3c0] sm:$0xff]
    %v247 = vld [vmem:[#allocation5 + $0x3c8] sm:$0xff]
    %v248 = vld [vmem:[#allocation5 + $0x3e0] sm:$0xff]
    %v249 = vld [vmem:[#allocation5 + $0x3e8] sm:$0xff]
    %v250 = vld [vmem:[#allocation5 + $0x400] sm:$0xff]
    %v251 = vld [vmem:[#allocation5 + $0x408] sm:$0xff]
    %v252 = vld [vmem:[#allocation5 + $0x420] sm:$0xff]
    %v253 = vld [vmem:[#allocation5 + $0x428] sm:$0xff]
    %v254 = vld [vmem:[#allocation5 + $0x440] sm:$0xff]
    %v255 = vld [vmem:[#allocation5 + $0x448] sm:$0xff]
    %v256 = vld [vmem:[#allocation5 + $0x460] sm:$0xff]
    %v257 = vld [vmem:[#allocation5 + $0x468] sm:$0xff]
    %v258 = vld [vmem:[#allocation5 + $0x480] sm:$0xff]
    %v259 = vld [vmem:[#allocation5 + $0x488] sm:$0xff]
    %v260 = vld [vmem:[#allocation5 + $0x4a0] sm:$0xff]
    %v261 = vld [vmem:[#allocation5 + $0x4a8] sm:$0xff]
    %v262 = vld [vmem:[#allocation5 + $0x4c0] sm:$0xff]
    %v263 = vld [vmem:[#allocation5 + $0x4c8] sm:$0xff]
    %v264 = vld [vmem:[#allocation5 + $0x4e0] sm:$0xff]
    %v265 = vld [vmem:[#allocation5 + $0x4e8] sm:$0xff]
    %v266 = vld [vmem:[#allocation5 + $0x500] sm:$0xff]
    %v267 = vld [vmem:[#allocation5 + $0x508] sm:$0xff]
    %v268 = vld [vmem:[#allocation5 + $0x520] sm:$0xff]
    %v269 = vld [vmem:[#allocation5 + $0x528] sm:$0xff]
    %v270 = vld [vmem:[#allocation5 + $0x540] sm:$0xff]
    %v271 = vld [vmem:[#allocation5 + $0x548] sm:$0xff]
    %v272 = vld [vmem:[#allocation5 + $0x560] sm:$0xff]
    %v273 = vld [vmem:[#allocation5 + $0x568] sm:$0xff]
    %v274 = vld [vmem:[#allocation5 + $0x580] sm:$0xff]
    %v275 = vld [vmem:[#allocation5 + $0x588] sm:$0xff]
    %v276 = vld [vmem:[#allocation5 + $0x5a0] sm:$0xff]
    %v277 = vld [vmem:[#allocation5 + $0x5a8] sm:$0xff]
    %v278 = vld [vmem:[#allocation5 + $0x5c0] sm:$0xff]
    %v279 = vld [vmem:[#allocation5 + $0x5c8] sm:$0xff]
    %v280 = vld [vmem:[#allocation5 + $0x5e0] sm:$0xff]
    %v281 = vld [vmem:[#allocation5 + $0x5e8] sm:$0xff]
    %s282 = scalar_lea.vmem [#allocation5], 1568
    %v283 = vld [vmem:[%s282] ss:$8 sm:$0x3]
    %v285 = vperm.slane %v283, 0
    %v286 = vperm.slane %v283, 1
    %289 = vmatpush.msra.mxu0 %v248
    %290 = vmatpush.msra.mxu0 %v246
    %291 = vmatpush.msra.mxu0 %v244
    %292 = vmatpush.msra.mxu0 %v242
    %293 = vmatpush.msra.mxu0 %v240
    %294 = vmatpush.msra.mxu0 %v238
    %295 = vmatpush.msra.mxu0 %v236
    %296 = vmatpush.msra.mxu0 %v234
    %297 = vmatpush.msra.mxu0 %v232
    %298 = vmatpush.msra.mxu0 %v230
    %299 = vmatpush.msra.mxu0 %v228
    %300 = vmatpush.msra.mxu0 %v226
    %301 = vmatpush.msra.mxu0 %v224
    %302 = vmatpush.msra.mxu0 %v222
    %303 = vmatpush.msra.mxu0 %v220
    %304 = vmatpush.msra.mxu0 %v218
    %305 = vmatmul.f32.gmra.mxu0 %v216
    %v306 = vpop.f32.mrf.mxu0
    %v307 = vadd.f32 %v285, %v306
    %308 = vdwg.mxu0
    %309 = vmatpush.msra.mxu0 %v280
    %310 = vmatpush.msra.mxu0 %v278
    %311 = vmatpush.msra.mxu0 %v276
    %312 = vmatpush.msra.mxu0 %v274
    %313 = vmatpush.msra.mxu0 %v272
    %314 = vmatpush.msra.mxu0 %v270
    %315 = vmatpush.msra.mxu0 %v268
    %316 = vmatpush.msra.mxu0 %v266
    %317 = vmatpush.msra.mxu0 %v264
    %318 = vmatpush.msra.mxu0 %v262
    %319 = vmatpush.msra.mxu0 %v260
    %320 = vmatpush.msra.mxu0 %v258
    %321 = vmatpush.msra.mxu0 %v256
    %322 = vmatpush.msra.mxu0 %v254
    %323 = vmatpush.msra.mxu0 %v252
    %324 = vmatpush.msra.mxu0 %v250
    %325 = vmatmul.f32.gmra.mxu0 %v217
    %v326 = vpop.f32.mrf.mxu0
    %v327 = vadd.f32 %v307, %v326
    %328 = vdwg.mxu0
    %329 = vmatpush.msra.mxu0 %v249
    %330 = vmatpush.msra.mxu0 %v247
    %331 = vmatpush.msra.mxu0 %v245
    %332 = vmatpush.msra.mxu0 %v243
    %333 = vmatpush.msra.mxu0 %v241
    %334 = vmatpush.msra.mxu0 %v239
    %335 = vmatpush.msra.mxu0 %v237
    %336 = vmatpush.msra.mxu0 %v235
    %337 = vmatpush.msra.mxu0 %v233
    %338 = vmatpush.msra.mxu0 %v231
    %339 = vmatpush.msra.mxu0 %v229
    %340 = vmatpush.msra.mxu0 %v227
    %341 = vmatpush.msra.mxu0 %v225
    %342 = vmatpush.msra.mxu0 %v223
    %343 = vmatpush.msra.mxu0 %v221
    %344 = vmatpush.msra.mxu0 %v219
    %345 = vmatmul.f32.gmra.mxu0 %v216
    %v346 = vpop.f32.mrf.mxu0
    %v347 = vadd.f32 %v286, %v346
    %348 = vdwg.mxu0
    %349 = vmatpush.msra.mxu0 %v281
    %350 = vmatpush.msra.mxu0 %v279
    %351 = vmatpush.msra.mxu0 %v277
    %352 = vmatpush.msra.mxu0 %v275
    %353 = vmatpush.msra.mxu0 %v273
    %354 = vmatpush.msra.mxu0 %v271
    %355 = vmatpush.msra.mxu0 %v269
    %356 = vmatpush.msra.mxu0 %v267
    %357 = vmatpush.msra.mxu0 %v265
    %358 = vmatpush.msra.mxu0 %v263
    %359 = vmatpush.msra.mxu0 %v261
    %360 = vmatpush.msra.mxu0 %v259
    %361 = vmatpush.msra.mxu0 %v257
    %362 = vmatpush.msra.mxu0 %v255
    %363 = vmatpush.msra.mxu0 %v253
    %364 = vmatpush.msra.mxu0 %v251
    %365 = vmatmul.f32.gmra.mxu0 %v217
    %v366 = vpop.f32.mrf.mxu0
    %v367 = vadd.f32 %v347, %v366
    %368 = vdwg.mxu0
    %v369 = vxor.u32 %v327, 2147483648
    %v370 = vxor.u32 %v367, 2147483648
    %v371 = vmul.f32 %v369, 1.442695
    %v372 = vpow.pop %v371
    %v373 = vmul.f32 %v370, 1.442695
    %v374 = vpow.pop %v373
    %v375 = vadd.f32 %v372, 1.0
    %v376 = vadd.f32 %v374, 1.0
    %v377 = vrcp.pop %v375
    %v378 = vmul.f32 %v375, %v377
    %v379 = vsub.f32 1.0, %v378
    %v380 = vmul.f32 %v377, %v379
    %v381 = vadd.f32 %v377, %v380
    %vm382 = vweird.f32 %v375
    %vm383 = vweird.f32 %v377
    %vm384 = vmor %vm382, %vm383
    %v385 = vsel %vm384, %v377, %v381
    %v386 = vand.u32 2147483647, %v375
    %vm387 = vcmp.eq.f32.partialorder %v386, 8.507059e+37
    %v388 = vand.u32 %v375, 2147483648
    %v389 = vor.u32 1.1754944e-38, %v388
    %v390 = vsel %vm387, %v389, %v385
    %v391 = vmul.f32 1.0, %v390
    %v392 = vrcp.pop %v376
    %v393 = vmul.f32 %v376, %v392
    %v394 = vsub.f32 1.0, %v393
    %v395 = vmul.f32 %v392, %v394
    %v396 = vadd.f32 %v392, %v395
    %vm397 = vweird.f32 %v376
    %vm398 = vweird.f32 %v392
    %vm399 = vmor %vm397, %vm398
    %v400 = vsel %vm399, %v392, %v396
    %v401 = vand.u32 2147483647, %v376
    %vm402 = vcmp.eq.f32.partialorder %v401, 8.507059e+37
    %v403 = vand.u32 %v376, 2147483648
    %v404 = vor.u32 1.1754944e-38, %v403
    %v405 = vsel %vm402, %v404, %v400
    %v406 = vmul.f32 1.0, %v405
    %v407 = vmul.f32 %v391, %v194
    %v408 = vmul.f32 %v406, %v214
    %v409 = vld [vmem:[#allocation7] sm:$0xff]
    %v410 = vld [vmem:[#allocation7 + $0x8] sm:$0xff]
    %v411 = vld [vmem:[#allocation7 + $0x10] sm:$0xff]
    %v412 = vld [vmem:[#allocation7 + $0x18] sm:$0xff]
    %v413 = vld [vmem:[#allocation7 + $0x20] sm:$0xff]
    %v414 = vld [vmem:[#allocation7 + $0x28] sm:$0xff]
    %v415 = vld [vmem:[#allocation7 + $0x30] sm:$0xff]
    %v416 = vld [vmem:[#allocation7 + $0x38] sm:$0xff]
    %v417 = vld [vmem:[#allocation7 + $0x40] sm:$0xff]
    %v418 = vld [vmem:[#allocation7 + $0x48] sm:$0xff]
    %v419 = vld [vmem:[#allocation7 + $0x50] sm:$0xff]
    %v420 = vld [vmem:[#allocation7 + $0x58] sm:$0xff]
    %v421 = vld [vmem:[#allocation7 + $0x60] sm:$0xff]
    %v422 = vld [vmem:[#allocation7 + $0x68] sm:$0xff]
    %v423 = vld [vmem:[#allocation7 + $0x70] sm:$0xff]
    %v424 = vld [vmem:[#allocation7 + $0x78] sm:$0xff]
    %v425 = vld [vmem:[#allocation7 + $0x80] sm:$0xff]
    %v426 = vld [vmem:[#allocation7 + $0x88] sm:$0xff]
    %v427 = vld [vmem:[#allocation7 + $0x90] sm:$0xff]
    %v428 = vld [vmem:[#allocation7 + $0x98] sm:$0xff]
    %v429 = vld [vmem:[#allocation7 + $0xa0] sm:$0xff]
    %v430 = vld [vmem:[#allocation7 + $0xa8] sm:$0xff]
    %v431 = vld [vmem:[#allocation7 + $0xb0] sm:$0xff]
    %v432 = vld [vmem:[#allocation7 + $0xb8] sm:$0xff]
    %v433 = vld [vmem:[#allocation7 + $0xc0] sm:$0xff]
    %v434 = vld [vmem:[#allocation7 + $0xc8] sm:$0xff]
    %v435 = vld [vmem:[#allocation7 + $0xd0] sm:$0xff]
    %v436 = vld [vmem:[#allocation7 + $0xd8] sm:$0xff]
    %v437 = vld [vmem:[#allocation7 + $0xe0] sm:$0xff]
    %v438 = vld [vmem:[#allocation7 + $0xe8] sm:$0xff]
    %v439 = vld [vmem:[#allocation7 + $0xf0] sm:$0xff]
    %v440 = vld [vmem:[#allocation7 + $0xf8] sm:$0xff]
    %v441 = vld [vmem:[#allocation7 + $0x100] sm:$0x1]
    %443 = vset.pattern.permute.xlu0 64
    %444 = vperm.xlu0 %443, %v60
    %v445 = vpop.permute.xlu0 %444
    %v447 = vperm.slane %v441, 0
    %v448 = vmul.f32 %v445, %v447
    %449 = vmatpush.msra.mxu0 %v424
    %450 = vmatpush.msra.mxu0 %v423
    %451 = vmatpush.msra.mxu0 %v422
    %452 = vmatpush.msra.mxu0 %v421
    %453 = vmatpush.msra.mxu0 %v420
    %454 = vmatpush.msra.mxu0 %v419
    %455 = vmatpush.msra.mxu0 %v418
    %456 = vmatpush.msra.mxu0 %v417
    %457 = vmatpush.msra.mxu0 %v416
    %458 = vmatpush.msra.mxu0 %v415
    %459 = vmatpush.msra.mxu0 %v414
    %460 = vmatpush.msra.mxu0 %v413
    %461 = vmatpush.msra.mxu0 %v412
    %462 = vmatpush.msra.mxu0 %v411
    %463 = vmatpush.msra.mxu0 %v410
    %464 = vmatpush.msra.mxu0 %v409
    %465 = vmatmul.f32.gmra.mxu0 %v407
    %v466 = vpop.f32.mrf.mxu0
    %v467 = vadd.f32 %v448, %v466
    %468 = vdwg.mxu0
    %469 = vmatpush.msra.mxu0 %v440
    %470 = vmatpush.msra.mxu0 %v439
    %471 = vmatpush.msra.mxu0 %v438
    %472 = vmatpush.msra.mxu0 %v437
    %473 = vmatpush.msra.mxu0 %v436
    %474 = vmatpush.msra.mxu0 %v435
    %475 = vmatpush.msra.mxu0 %v434
    %476 = vmatpush.msra.mxu0 %v433
    %477 = vmatpush.msra.mxu0 %v432
    %478 = vmatpush.msra.mxu0 %v431
    %479 = vmatpush.msra.mxu0 %v430
    %480 = vmatpush.msra.mxu0 %v429
    %481 = vmatpush.msra.mxu0 %v428
    %482 = vmatpush.msra.mxu0 %v427
    %483 = vmatpush.msra.mxu0 %v426
    %484 = vmatpush.msra.mxu0 %v425
    %485 = vmatmul.f32.gmra.mxu0 %v408
    %v486 = vpop.f32.mrf.mxu0
    %v487 = vadd.f32 %v467, %v486
    %488 = vdwg.mxu0
    %v489 = vld [vmem:[#allocation7 + $0x208] sm:$0x1]
    %v490 = vperm.slane %v489, 0
    %v491 = vadd.f32 %v487, %v490
    %v492 = vmax.f32 %v491, 0.0
    %v493 = vld [vmem:[#allocation7 + $0x108] sm:$0xff]
    %v494 = vld [vmem:[#allocation7 + $0x110] sm:$0xff]
    %v495 = vld [vmem:[#allocation7 + $0x118] sm:$0xff]
    %v496 = vld [vmem:[#allocation7 + $0x120] sm:$0xff]
    %v497 = vld [vmem:[#allocation7 + $0x128] sm:$0xff]
    %v498 = vld [vmem:[#allocation7 + $0x130] sm:$0xff]
    %v499 = vld [vmem:[#allocation7 + $0x138] sm:$0xff]
    %v500 = vld [vmem:[#allocation7 + $0x140] sm:$0xff]
    %v501 = vld [vmem:[#allocation7 + $0x148] sm:$0xff]
    %v502 = vld [vmem:[#allocation7 + $0x150] sm:$0xff]
    %v503 = vld [vmem:[#allocation7 + $0x158] sm:$0xff]
    %v504 = vld [vmem:[#allocation7 + $0x160] sm:$0xff]
    %v505 = vld [vmem:[#allocation7 + $0x168] sm:$0xff]
    %v506 = vld [vmem:[#allocation7 + $0x170] sm:$0xff]
    %v507 = vld [vmem:[#allocation7 + $0x178] sm:$0xff]
    %v508 = vld [vmem:[#allocation7 + $0x180] sm:$0xff]
    %v509 = vld [vmem:[#allocation7 + $0x210] sm:$0x1]
    %v510 = vperm.slane %v509, 0
    %511 = vmatpush.msra.mxu0 %v508
    %512 = vmatpush.msra.mxu0 %v507
    %513 = vmatpush.msra.mxu0 %v506
    %514 = vmatpush.msra.mxu0 %v505
    %515 = vmatpush.msra.mxu0 %v504
    %516 = vmatpush.msra.mxu0 %v503
    %517 = vmatpush.msra.mxu0 %v502
    %518 = vmatpush.msra.mxu0 %v501
    %519 = vmatpush.msra.mxu0 %v500
    %520 = vmatpush.msra.mxu0 %v499
    %521 = vmatpush.msra.mxu0 %v498
    %522 = vmatpush.msra.mxu0 %v497
    %523 = vmatpush.msra.mxu0 %v496
    %524 = vmatpush.msra.mxu0 %v495
    %525 = vmatpush.msra.mxu0 %v494
    %526 = vmatpush.msra.mxu0 %v493
    %527 = vmatmul.f32.gmra.mxu0 %v492
    %v528 = vpop.f32.mrf.mxu0
    %v529 = vadd.f32 %v510, %v528
    %530 = vdwg.mxu0
    %v531 = vmax.f32 %v529, 0.0
    %v532 = vld [vmem:[#allocation7 + $0x188] sm:$0xff]
    %v533 = vld [vmem:[#allocation7 + $0x190] sm:$0xff]
    %v534 = vld [vmem:[#allocation7 + $0x198] sm:$0xff]
    %v535 = vld [vmem:[#allocation7 + $0x1a0] sm:$0xff]
    %v536 = vld [vmem:[#allocation7 + $0x1a8] sm:$0xff]
    %v537 = vld [vmem:[#allocation7 + $0x1b0] sm:$0xff]
    %v538 = vld [vmem:[#allocation7 + $0x1b8] sm:$0xff]
    %v539 = vld [vmem:[#allocation7 + $0x1c0] sm:$0xff]
    %v540 = vld [vmem:[#allocation7 + $0x1c8] sm:$0xff]
    %v541 = vld [vmem:[#allocation7 + $0x1d0] sm:$0xff]
    %v542 = vld [vmem:[#allocation7 + $0x1d8] sm:$0xff]
    %v543 = vld [vmem:[#allocation7 + $0x1e0] sm:$0xff]
    %v544 = vld [vmem:[#allocation7 + $0x1e8] sm:$0xff]
    %v545 = vld [vmem:[#allocation7 + $0x1f0] sm:$0xff]
    %v546 = vld [vmem:[#allocation7 + $0x1f8] sm:$0xff]
    %v547 = vld [vmem:[#allocation7 + $0x200] sm:$0xff]
    %v548 = vld [vmem:[#allocation7 + $0x218] sm:$0x1]
    %v549 = vperm.slane %v548, 0
    %550 = vmatpush.msra.mxu0 %v547
    %551 = vmatpush.msra.mxu0 %v546
    %552 = vmatpush.msra.mxu0 %v545
    %553 = vmatpush.msra.mxu0 %v544
    %554 = vmatpush.msra.mxu0 %v543
    %555 = vmatpush.msra.mxu0 %v542
    %556 = vmatpush.msra.mxu0 %v541
    %557 = vmatpush.msra.mxu0 %v540
    %558 = vmatpush.msra.mxu0 %v539
    %559 = vmatpush.msra.mxu0 %v538
    %560 = vmatpush.msra.mxu0 %v537
    %561 = vmatpush.msra.mxu0 %v536
    %562 = vmatpush.msra.mxu0 %v535
    %563 = vmatpush.msra.mxu0 %v534
    %564 = vmatpush.msra.mxu0 %v533
    %565 = vmatpush.msra.mxu0 %v532
    %566 = vmatmul.f32.gmra.mxu0 %v531
    %v567 = vpop.f32.mrf.mxu0
    %v568 = vadd.f32 %v549, %v567
    %569 = vdwg.mxu0
    %570 = vst [vmem:[#allocation8] sm:$0xff] %v568
    // Predicated region
    $region26: #{tpu_custom_call.1} parent=1 // pred_check
      _
    $region27: #{tpu_custom_call.1} parent=1 // pred_check_branch
      %572 = sbr.rel (0) target = $region29
    $region28: #{tpu_custom_call.1} parent=1 // pred_region
      %574 = vsyncadd [#allocation4], 0
      %s576 = sshll.u32 [#allocation8], 4
      %s577 = int_to_ptr.vmem [resolvable:$true] %s576
      %s578 = sshll.u32 %s3, 4
      %s579 = int_to_ptr.hbm [resolvable:$true] %s578
      %581 = dma.vmem_to_hbm [thread:$0]  %s577, 128, %s579, [#allocation4]
    $region29: #{tpu_custom_call.1} parent=1 // pred_fallthru
      _
    // Predicated region
    $region30: #{tpu_custom_call.1} parent=1 // pred_check
      _
    $region31: #{tpu_custom_call.1} parent=1 // pred_check_branch
      %583 = sbr.rel (0) target = $region33
    $region32: #{tpu_custom_call.1} parent=1 // pred_region
      %585 = dma.done [#allocation4], 128
    $region33: #{tpu_custom_call.1} parent=1 // pred_fallthru
      _
    %586 = vsyncpa [#allocation3], 1
    %587 = vsyncpa [#allocation6], 1
    %588 = vsyncpa [#allocation4], 1

</llo_original>
